<compile_context>
chip_gen: v7x
topology: tpu7x:2x2x1
jax: 0.10.0
libtpu: 0.0.40
codegen_flags: <defaults>
</compile_context>

<pallas_src>
import functools

import jax
import jax.numpy as jnp
from jax.experimental import pallas as pl
from jax.experimental.pallas import tpu as pltpu

LANE = 128  # TPU vreg lane width; channel axes are padded up to this.


def _round_up(x, m):
    return (x + m - 1) // m * m


def dsconv_fused_kernel(xp_ref, dw_ref, pw_ref, scale_ref, shift_ref, o_ref,
                        *, relu):
    """Fused depthwise-3x3 -> pointwise-1x1 -> BN(eval) -> ReLU on one row tile.

    xp_ref   : (1, H+2, W+2, Cin_p)  padded image of one batch element
               (block index is constant along the row-tile grid axis, so it
               stays resident in VMEM across row tiles of the same image)
    dw_ref   : (3, 3, Cin_p)         depthwise filters
    pw_ref   : (Cin_p, Cout_p)       pointwise weights
    scale_ref: (1, Cout_p)           folded BN scale  (gamma / sqrt(var+eps))
    shift_ref: (1, Cout_p)           folded BN shift  (beta - mean*scale)
    o_ref    : (1, TH, W, Cout_p)    output row tile
    """
    _, TH, W, Cout_p = o_ref.shape
    Cin_p = xp_ref.shape[-1]
    KH, KW = dw_ref.shape[0], dw_ref.shape[1]

    # First padded input row needed by this output row tile.
    row0 = pl.multiple_of(pl.program_id(1) * TH, TH)

    # Depthwise 3x3, stride 1.  Each tap is read straight from the input ref
    # (offset vector loads on the vld slots) and accumulated in f32; the
    # depthwise result never touches HBM.
    acc = jnp.zeros((1, TH, W, Cin_p), jnp.float32)
    for dy in range(KH):
        for dx in range(KW):
            tap = xp_ref[:, pl.ds(row0 + dy, TH), dx:dx + W, :]
            w = dw_ref[dy:dy + 1, dx:dx + 1, :]          # (1, 1, Cin_p)
            acc = acc + tap.astype(jnp.float32) * w

    # Pointwise 1x1 conv as a lane-dense MXU matmul over the channel axis,
    # with eval-mode BatchNorm folded into per-channel scale/shift, then ReLU.
    y = jnp.dot(acc.reshape(TH * W, Cin_p), pw_ref[...],
                preferred_element_type=jnp.float32)
    y = y * scale_ref[...] + shift_ref[...]
    if relu:
        y = jnp.maximum(y, 0.0)
    o_ref[...] = y.reshape(1, TH, W, Cout_p).astype(o_ref.dtype)


def dsconv_forward(x_nchw, dw_weight, pw_weight, gamma, beta, run_mean,
                   run_var, eps=1e-5, relu=True):
    """DSConv forward (eval-mode BN).

    x_nchw   : (N, Cin, H, W)
    dw_weight: (Cin, 1, 3, 3)   PyTorch depthwise layout
    pw_weight: (Cout, Cin, 1, 1)
    Returns  : (N, Cout, H, W)
    Assumes module defaults: kernel_size=3, stride=1, padding=1, bias=False.
    """
    # TODO(synk): stride != 1, padding != 1, kernel_size != 3 and bias=True are not implemented.
    # TODO(synk): training-mode BatchNorm (batch statistics + running-stat updates) not implemented.
    # TODO(synk): for very large H*W*C the whole padded image block should be replaced by
    #             halo-tiled row blocks (pl.Element / manual DMA) to bound VMEM.
    N, Cin, H, W = x_nchw.shape
    Cout = pw_weight.shape[0]
    KH, KW = dw_weight.shape[2], dw_weight.shape[3]

    Cin_p = _round_up(Cin, LANE)
    Cout_p = _round_up(Cout, LANE)
    TH = 8 if H % 8 == 0 else H              # row-tile height (multiple of 8)

    # --- glue: NCHW -> NHWC; one pad pass covers both the conv halo
    # (padding=1) and lane-alignment of the channel axis (Cin -> Cin_p). ---
    x = jnp.transpose(x_nchw, (0, 2, 3, 1))                         # NHWC
    xp = jnp.pad(x, ((0, 0), (1, 1), (1, 1), (0, Cin_p - Cin)))     # (N,H+2,W+2,Cin_p)

    dw = jnp.transpose(dw_weight[:, 0], (1, 2, 0))                  # (3, 3, Cin)
    dw = jnp.pad(dw, ((0, 0), (0, 0), (0, Cin_p - Cin))).astype(jnp.float32)
    pw = jnp.transpose(pw_weight[:, :, 0, 0], (1, 0))               # (Cin, Cout)
    pw = jnp.pad(pw, ((0, Cin_p - Cin), (0, Cout_p - Cout))).astype(jnp.float32)

    # Fold eval-mode BatchNorm into per-channel scale/shift (padded lanes -> 0).
    inv_std = gamma / jnp.sqrt(run_var + eps)
    scale = jnp.pad(inv_std, (0, Cout_p - Cout)).reshape(1, Cout_p).astype(jnp.float32)
    shift = jnp.pad(beta - run_mean * inv_std,
                    (0, Cout_p - Cout)).reshape(1, Cout_p).astype(jnp.float32)

    grid = (N, H // TH)
    itemsize = x.dtype.itemsize
    cost = pl.CostEstimate(
        flops=2 * N * H * W * Cin_p * (KH * KW + Cout_p),
        transcendentals=0,
        bytes_accessed=(xp.size + dw.size + pw.size + scale.size + shift.size
                        + N * H * W * Cout_p) * itemsize,
    )

    y = pl.pallas_call(
        functools.partial(dsconv_fused_kernel, relu=relu),
        out_shape=jax.ShapeDtypeStruct((N, H, W, Cout_p), x.dtype),
        grid=grid,
        in_specs=[
            pl.BlockSpec((1, H + 2, W + 2, Cin_p), lambda n, h: (n, 0, 0, 0)),
            pl.BlockSpec((KH, KW, Cin_p), lambda n, h: (0, 0, 0)),
            pl.BlockSpec((Cin_p, Cout_p), lambda n, h: (0, 0)),
            pl.BlockSpec((1, Cout_p), lambda n, h: (0, 0)),
            pl.BlockSpec((1, Cout_p), lambda n, h: (0, 0)),
        ],
        out_specs=pl.BlockSpec((1, TH, W, Cout_p), lambda n, h: (n, h, 0, 0)),
        compiler_params=pltpu.CompilerParams(
            dimension_semantics=("parallel", "parallel"),
            vmem_limit_bytes=48 * 1024 * 1024,
        ),
        cost_estimate=cost,
    )(xp, dw, pw, scale, shift)

    y = y[..., :Cout]                          # drop channel lane padding
    return jnp.transpose(y, (0, 3, 1, 2))      # back to NCHW


def dsconv_reference(x, dw_weight, pw_weight, gamma, beta, run_mean, run_var,
                     eps=1e-5, relu=True):
    """Pure-JAX reference for the same eval-mode forward pass."""
    dw_out = jax.lax.conv_general_dilated(
        x, dw_weight, window_strides=(1, 1), padding=((1, 1), (1, 1)),
        dimension_numbers=("NCHW", "OIHW", "NCHW"),
        feature_group_count=x.shape[1])
    pw_out = jax.lax.conv_general_dilated(
        dw_out, pw_weight, window_strides=(1, 1), padding="VALID",
        dimension_numbers=("NCHW", "OIHW", "NCHW"))
    inv_std = gamma / jnp.sqrt(run_var + eps)
    y = (pw_out * inv_std[None, :, None, None]
         + (beta - run_mean * inv_std)[None, :, None, None])
    return jnp.maximum(y, 0.0) if relu else y


if __name__ == "__main__":
    nin, nout = 4, 8
    N, H, W = 2, 16, 16

    key = jax.random.PRNGKey(0)
    k_x, k_dw, k_pw, k_g, k_b, k_rm, k_rv = jax.random.split(key, 7)

    x = jax.random.normal(k_x, (N, nin, H, W), dtype=jnp.float32)
    # depthwise Conv2d(nin, nin, 3, groups=nin, bias=False) -> weight (nin, 1, 3, 3)
    dw_weight = jax.random.normal(k_dw, (nin, 1, 3, 3), dtype=jnp.float32) * 0.1
    # pointwise Conv2d(nin, nout, 1, bias=False) -> weight (nout, nin, 1, 1)
    pw_weight = jax.random.normal(k_pw, (nout, nin, 1, 1), dtype=jnp.float32) * 0.1
    # BatchNorm2d(nout) params / running stats (deterministic synthetic values)
    gamma = 1.0 + 0.1 * jax.random.normal(k_g, (nout,), dtype=jnp.float32)
    beta = 0.1 * jax.random.normal(k_b, (nout,), dtype=jnp.float32)
    run_mean = 0.1 * jax.random.normal(k_rm, (nout,), dtype=jnp.float32)
    run_var = jnp.abs(jax.random.normal(k_rv, (nout,), dtype=jnp.float32)) + 0.5

    out = dsconv_forward(x, dw_weight, pw_weight, gamma, beta, run_mean, run_var)
    out = jax.block_until_ready(out)

    ref = dsconv_reference(x, dw_weight, pw_weight, gamma, beta, run_mean, run_var)
    ref = jax.block_until_ready(ref)

    assert out.shape == (N, nout, H, W), out.shape
    assert bool(jnp.all(jnp.isfinite(out)))
    assert bool(jnp.all(out >= 0.0))  # ReLU applied
    max_err = float(jnp.max(jnp.abs(out - ref)))
    assert max_err < 1e-3, f"max abs error vs reference: {max_err}"
    print("KERNEL_OK")
</pallas_src>

<mosaic_0001>
module attributes {stable_mosaic.version = 11 : i64} {
  func.func @dsconv_fused_kernel(%arg0: i32, %arg1: i32, %arg2: memref<1x18x18x128xf32, #tpu.memory_space<vmem>>, %arg3: memref<3x3x128xf32, #tpu.memory_space<vmem>>, %arg4: memref<128x128xf32, #tpu.memory_space<vmem>>, %arg5: memref<1x128xf32, #tpu.memory_space<vmem>>, %arg6: memref<1x128xf32, #tpu.memory_space<vmem>>, %arg7: memref<1x8x16x128xf32, #tpu.memory_space<vmem>>) attributes {dimension_semantics = [#tpu.dimension_semantics<parallel>, #tpu.dimension_semantics<parallel>], iteration_bounds = array<i64: 2, 2>, scalar_prefetch = 0 : i64, scratch_operands = 0 : i64, tpu.core_type = #tpu.core_type<tc>, window_params = [{transform_indices = @transform_0, window_bounds = array<i64: 1, 18, 18, 128>}, {pipeline_mode = #tpu.pipeline_mode<synchronous>, transform_indices = @transform_1, window_bounds = array<i64: 3, 3, 128>}, {pipeline_mode = #tpu.pipeline_mode<synchronous>, transform_indices = @transform_2, window_bounds = array<i64: 128, 128>}, {pipeline_mode = #tpu.pipeline_mode<synchronous>, transform_indices = @transform_3, window_bounds = array<i64: 1, 128>}, {pipeline_mode = #tpu.pipeline_mode<synchronous>, transform_indices = @transform_4, window_bounds = array<i64: 1, 128>}, {transform_indices = @transform_5, window_bounds = array<i64: 1, 8, 16, 128>}]} {
    %c8_i32 = arith.constant 8 : i32
    %0 = arith.muli %arg1, %c8_i32 : i32
    %1 = tpu.assume_multiple %0, 8 : i32
    %cst = arith.constant 0.000000e+00 : f32
    %2 = vector.broadcast %cst : f32 to vector<1x8x16x128xf32>
    %c0_i32 = arith.constant 0 : i32
    %3 = arith.addi %1, %c0_i32 : i32
    %c0 = arith.constant 0 : index
    %4 = arith.index_cast %3 : i32 to index
    %c0_0 = arith.constant 0 : index
    %c0_1 = arith.constant 0 : index
    %5 = vector.load %arg2[%c0, %4, %c0_0, %c0_1] : memref<1x18x18x128xf32, #tpu.memory_space<vmem>>, vector<1x8x16x128xf32>
    %c0_2 = arith.constant 0 : index
    %c0_3 = arith.constant 0 : index
    %c0_4 = arith.constant 0 : index
    %6 = vector.load %arg3[%c0_2, %c0_3, %c0_4] : memref<3x3x128xf32, #tpu.memory_space<vmem>>, vector<1x1x128xf32>
    %7 = vector.shape_cast %6 : vector<1x1x128xf32> to vector<1x1x1x128xf32>
    %8 = vector.broadcast %7 : vector<1x1x1x128xf32> to vector<1x8x16x128xf32>
    %9 = arith.mulf %5, %8 : vector<1x8x16x128xf32>
    %10 = arith.addf %2, %9 : vector<1x8x16x128xf32>
    %c0_i32_5 = arith.constant 0 : i32
    %11 = arith.addi %1, %c0_i32_5 : i32
    %c0_6 = arith.constant 0 : index
    %12 = arith.index_cast %11 : i32 to index
    %c1 = arith.constant 1 : index
    %c0_7 = arith.constant 0 : index
    %13 = vector.load %arg2[%c0_6, %12, %c1, %c0_7] : memref<1x18x18x128xf32, #tpu.memory_space<vmem>>, vector<1x8x16x128xf32>
    %c0_8 = arith.constant 0 : index
    %c1_9 = arith.constant 1 : index
    %c0_10 = arith.constant 0 : index
    %14 = vector.load %arg3[%c0_8, %c1_9, %c0_10] : memref<3x3x128xf32, #tpu.memory_space<vmem>>, vector<1x1x128xf32>
    %15 = vector.shape_cast %14 : vector<1x1x128xf32> to vector<1x1x1x128xf32>
    %16 = vector.broadcast %15 : vector<1x1x1x128xf32> to vector<1x8x16x128xf32>
    %17 = arith.mulf %13, %16 : vector<1x8x16x128xf32>
    %18 = arith.addf %10, %17 : vector<1x8x16x128xf32>
    %c0_i32_11 = arith.constant 0 : i32
    %19 = arith.addi %1, %c0_i32_11 : i32
    %c0_12 = arith.constant 0 : index
    %20 = arith.index_cast %19 : i32 to index
    %c2 = arith.constant 2 : index
    %c0_13 = arith.constant 0 : index
    %21 = vector.load %arg2[%c0_12, %20, %c2, %c0_13] : memref<1x18x18x128xf32, #tpu.memory_space<vmem>>, vector<1x8x16x128xf32>
    %c0_14 = arith.constant 0 : index
    %c2_15 = arith.constant 2 : index
    %c0_16 = arith.constant 0 : index
    %22 = vector.load %arg3[%c0_14, %c2_15, %c0_16] : memref<3x3x128xf32, #tpu.memory_space<vmem>>, vector<1x1x128xf32>
    %23 = vector.shape_cast %22 : vector<1x1x128xf32> to vector<1x1x1x128xf32>
    %24 = vector.broadcast %23 : vector<1x1x1x128xf32> to vector<1x8x16x128xf32>
    %25 = arith.mulf %21, %24 : vector<1x8x16x128xf32>
    %26 = arith.addf %18, %25 : vector<1x8x16x128xf32>
    %c1_i32 = arith.constant 1 : i32
    %27 = arith.addi %1, %c1_i32 : i32
    %c0_17 = arith.constant 0 : index
    %28 = arith.index_cast %27 : i32 to index
    %c0_18 = arith.constant 0 : index
    %c0_19 = arith.constant 0 : index
    %29 = vector.load %arg2[%c0_17, %28, %c0_18, %c0_19] : memref<1x18x18x128xf32, #tpu.memory_space<vmem>>, vector<1x8x16x128xf32>
    %c1_20 = arith.constant 1 : index
    %c0_21 = arith.constant 0 : index
    %c0_22 = arith.constant 0 : index
    %30 = vector.load %arg3[%c1_20, %c0_21, %c0_22] : memref<3x3x128xf32, #tpu.memory_space<vmem>>, vector<1x1x128xf32>
    %31 = vector.shape_cast %30 : vector<1x1x128xf32> to vector<1x1x1x128xf32>
    %32 = vector.broadcast %31 : vector<1x1x1x128xf32> to vector<1x8x16x128xf32>
    %33 = arith.mulf %29, %32 : vector<1x8x16x128xf32>
    %34 = arith.addf %26, %33 : vector<1x8x16x128xf32>
    %c1_i32_23 = arith.constant 1 : i32
    %35 = arith.addi %1, %c1_i32_23 : i32
    %c0_24 = arith.constant 0 : index
    %36 = arith.index_cast %35 : i32 to index
    %c1_25 = arith.constant 1 : index
    %c0_26 = arith.constant 0 : index
    %37 = vector.load %arg2[%c0_24, %36, %c1_25, %c0_26] : memref<1x18x18x128xf32, #tpu.memory_space<vmem>>, vector<1x8x16x128xf32>
    %c1_27 = arith.constant 1 : index
    %c1_28 = arith.constant 1 : index
    %c0_29 = arith.constant 0 : index
    %38 = vector.load %arg3[%c1_27, %c1_28, %c0_29] : memref<3x3x128xf32, #tpu.memory_space<vmem>>, vector<1x1x128xf32>
    %39 = vector.shape_cast %38 : vector<1x1x128xf32> to vector<1x1x1x128xf32>
    %40 = vector.broadcast %39 : vector<1x1x1x128xf32> to vector<1x8x16x128xf32>
    %41 = arith.mulf %37, %40 : vector<1x8x16x128xf32>
    %42 = arith.addf %34, %41 : vector<1x8x16x128xf32>
    %c1_i32_30 = arith.constant 1 : i32
    %43 = arith.addi %1, %c1_i32_30 : i32
    %c0_31 = arith.constant 0 : index
    %44 = arith.index_cast %43 : i32 to index
    %c2_32 = arith.constant 2 : index
    %c0_33 = arith.constant 0 : index
    %45 = vector.load %arg2[%c0_31, %44, %c2_32, %c0_33] : memref<1x18x18x128xf32, #tpu.memory_space<vmem>>, vector<1x8x16x128xf32>
    %c1_34 = arith.constant 1 : index
    %c2_35 = arith.constant 2 : index
    %c0_36 = arith.constant 0 : index
    %46 = vector.load %arg3[%c1_34, %c2_35, %c0_36] : memref<3x3x128xf32, #tpu.memory_space<vmem>>, vector<1x1x128xf32>
    %47 = vector.shape_cast %46 : vector<1x1x128xf32> to vector<1x1x1x128xf32>
    %48 = vector.broadcast %47 : vector<1x1x1x128xf32> to vector<1x8x16x128xf32>
    %49 = arith.mulf %45, %48 : vector<1x8x16x128xf32>
    %50 = arith.addf %42, %49 : vector<1x8x16x128xf32>
    %c2_i32 = arith.constant 2 : i32
    %51 = arith.addi %1, %c2_i32 : i32
    %c0_37 = arith.constant 0 : index
    %52 = arith.index_cast %51 : i32 to index
    %c0_38 = arith.constant 0 : index
    %c0_39 = arith.constant 0 : index
    %53 = vector.load %arg2[%c0_37, %52, %c0_38, %c0_39] : memref<1x18x18x128xf32, #tpu.memory_space<vmem>>, vector<1x8x16x128xf32>
    %c2_40 = arith.constant 2 : index
    %c0_41 = arith.constant 0 : index
    %c0_42 = arith.constant 0 : index
    %54 = vector.load %arg3[%c2_40, %c0_41, %c0_42] : memref<3x3x128xf32, #tpu.memory_space<vmem>>, vector<1x1x128xf32>
    %55 = vector.shape_cast %54 : vector<1x1x128xf32> to vector<1x1x1x128xf32>
    %56 = vector.broadcast %55 : vector<1x1x1x128xf32> to vector<1x8x16x128xf32>
    %57 = arith.mulf %53, %56 : vector<1x8x16x128xf32>
    %58 = arith.addf %50, %57 : vector<1x8x16x128xf32>
    %c2_i32_43 = arith.constant 2 : i32
    %59 = arith.addi %1, %c2_i32_43 : i32
    %c0_44 = arith.constant 0 : index
    %60 = arith.index_cast %59 : i32 to index
    %c1_45 = arith.constant 1 : index
    %c0_46 = arith.constant 0 : index
    %61 = vector.load %arg2[%c0_44, %60, %c1_45, %c0_46] : memref<1x18x18x128xf32, #tpu.memory_space<vmem>>, vector<1x8x16x128xf32>
    %c2_47 = arith.constant 2 : index
    %c1_48 = arith.constant 1 : index
    %c0_49 = arith.constant 0 : index
    %62 = vector.load %arg3[%c2_47, %c1_48, %c0_49] : memref<3x3x128xf32, #tpu.memory_space<vmem>>, vector<1x1x128xf32>
    %63 = vector.shape_cast %62 : vector<1x1x128xf32> to vector<1x1x1x128xf32>
    %64 = vector.broadcast %63 : vector<1x1x1x128xf32> to vector<1x8x16x128xf32>
    %65 = arith.mulf %61, %64 : vector<1x8x16x128xf32>
    %66 = arith.addf %58, %65 : vector<1x8x16x128xf32>
    %c2_i32_50 = arith.constant 2 : i32
    %67 = arith.addi %1, %c2_i32_50 : i32
    %c0_51 = arith.constant 0 : index
    %68 = arith.index_cast %67 : i32 to index
    %c2_52 = arith.constant 2 : index
    %c0_53 = arith.constant 0 : index
    %69 = vector.load %arg2[%c0_51, %68, %c2_52, %c0_53] : memref<1x18x18x128xf32, #tpu.memory_space<vmem>>, vector<1x8x16x128xf32>
    %c2_54 = arith.constant 2 : index
    %c2_55 = arith.constant 2 : index
    %c0_56 = arith.constant 0 : index
    %70 = vector.load %arg3[%c2_54, %c2_55, %c0_56] : memref<3x3x128xf32, #tpu.memory_space<vmem>>, vector<1x1x128xf32>
    %71 = vector.shape_cast %70 : vector<1x1x128xf32> to vector<1x1x1x128xf32>
    %72 = vector.broadcast %71 : vector<1x1x1x128xf32> to vector<1x8x16x128xf32>
    %73 = arith.mulf %69, %72 : vector<1x8x16x128xf32>
    %74 = arith.addf %66, %73 : vector<1x8x16x128xf32>
    %75 = vector.shape_cast %74 : vector<1x8x16x128xf32> to vector<128x128xf32>
    %c0_57 = arith.constant 0 : index
    %c0_58 = arith.constant 0 : index
    %76 = vector.load %arg4[%c0_57, %c0_58] : memref<128x128xf32, #tpu.memory_space<vmem>>, vector<128x128xf32>
    %cst_59 = arith.constant dense<0.000000e+00> : vector<128x128xf32>
    %77 = tpu.matmul %75, %76, %cst_59 {dimension_numbers = #tpu.dot_dimension_numbers<[1], [0], [0], [1], [0, 0, 1, 1], [], []>} : vector<128x128xf32>, vector<128x128xf32>, vector<128x128xf32> -> vector<128x128xf32>
    %c0_60 = arith.constant 0 : index
    %c0_61 = arith.constant 0 : index
    %78 = vector.load %arg5[%c0_60, %c0_61] : memref<1x128xf32, #tpu.memory_space<vmem>>, vector<1x128xf32>
    %79 = vector.broadcast %78 : vector<1x128xf32> to vector<128x128xf32>
    %80 = arith.mulf %77, %79 : vector<128x128xf32>
    %c0_62 = arith.constant 0 : index
    %c0_63 = arith.constant 0 : index
    %81 = vector.load %arg6[%c0_62, %c0_63] : memref<1x128xf32, #tpu.memory_space<vmem>>, vector<1x128xf32>
    %82 = vector.broadcast %81 : vector<1x128xf32> to vector<128x128xf32>
    %83 = arith.addf %80, %82 : vector<128x128xf32>
    %cst_64 = arith.constant 0.000000e+00 : f32
    %84 = vector.broadcast %cst_64 : f32 to vector<128x128xf32>
    %85 = arith.maximumf %83, %84 : vector<128x128xf32>
    %86 = vector.shape_cast %85 : vector<128x128xf32> to vector<1x8x16x128xf32>
    %c0_65 = arith.constant 0 : index
    %c0_66 = arith.constant 0 : index
    %c0_67 = arith.constant 0 : index
    %c0_68 = arith.constant 0 : index
    %87 = vector.load %arg7[%c0_65, %c0_66, %c0_67, %c0_68] : memref<1x8x16x128xf32, #tpu.memory_space<vmem>>, vector<1x8x16x128xf32>
    tpu.vector_store %arg7[%c0_65, %c0_66, %c0_67, %c0_68], %86 {strides = array<i32>} : memref<1x8x16x128xf32, #tpu.memory_space<vmem>>, vector<1x8x16x128xf32>,
    return
  }
  func.func @transform_0(%arg0: i32, %arg1: i32) -> (i32, i32, i32, i32) {
    %c0_i32 = arith.constant 0 : i32
    %c0_i32_0 = arith.constant 0 : i32
    %c0_i32_1 = arith.constant 0 : i32
    %c0_i32_2 = arith.constant 0 : i32
    return %arg0, %c0_i32, %c0_i32_0, %c0_i32_1 : i32, i32, i32, i32
  }
  func.func @transform_1(%arg0: i32, %arg1: i32) -> (i32, i32, i32) {
    %c0_i32 = arith.constant 0 : i32
    %c0_i32_0 = arith.constant 0 : i32
    %c0_i32_1 = arith.constant 0 : i32
    %c0_i32_2 = arith.constant 0 : i32
    return %c0_i32, %c0_i32_0, %c0_i32_1 : i32, i32, i32
  }
  func.func @transform_2(%arg0: i32, %arg1: i32) -> (i32, i32) {
    %c0_i32 = arith.constant 0 : i32
    %c0_i32_0 = arith.constant 0 : i32
    %c0_i32_1 = arith.constant 0 : i32
    return %c0_i32, %c0_i32_0 : i32, i32
  }
  func.func @transform_3(%arg0: i32, %arg1: i32) -> (i32, i32) {
    %c0_i32 = arith.constant 0 : i32
    %c0_i32_0 = arith.constant 0 : i32
    %c0_i32_1 = arith.constant 0 : i32
    return %c0_i32, %c0_i32_0 : i32, i32
  }
  func.func @transform_4(%arg0: i32, %arg1: i32) -> (i32, i32) {
    %c0_i32 = arith.constant 0 : i32
    %c0_i32_0 = arith.constant 0 : i32
    %c0_i32_1 = arith.constant 0 : i32
    return %c0_i32, %c0_i32_0 : i32, i32
  }
  func.func @transform_5(%arg0: i32, %arg1: i32) -> (i32, i32, i32, i32) {
    %c0_i32 = arith.constant 0 : i32
    %c0_i32_0 = arith.constant 0 : i32
    %c0_i32_1 = arith.constant 0 : i32
    return %arg0, %arg1, %c0_i32, %c0_i32_0 : i32, i32, i32, i32
  }
}

</mosaic_0001>

<llo_original>
// kernel: tpu_custom_call.1
$region0: #{tpu_custom_call.1}
  #allocation0 [shape = 'u32[]', space=smem, size = 0x4, offset = 0x4, fixed_abs, tag = 'smem constant byte address 0x4 - core index']
  #allocation1 [shape = 'u32[144,128]{1,0:T(1,128)}', space=vmem, size = 0x12000, scoped, tag = 'internal scratch']
  %s0 = inlined_call_operand.vmem [shape: f32[2,18,18,128], index: 0, kind: input, shape index: {}]
  %s1 = inlined_call_operand.vmem [shape: f32[3,3,128], index: 1, kind: input, shape index: {}]
  %s2 = inlined_call_operand.vmem [shape: f32[128,128], index: 2, kind: input, shape index: {}]
  %s3 = inlined_call_operand.vmem [shape: f32[1,128], index: 3, kind: input, shape index: {}]
  %s4 = inlined_call_operand.vmem [shape: f32[1,128], index: 4, kind: input, shape index: {}]
  %s5 = inlined_call_operand.hbm [shape: f32[2,16,16,128], index: 5, kind: output, shape index: {}]
  %s6 = sld [smem:[#allocation0]]
  $region53: #{tpu_custom_call.1} parent=0
    _
  %s8 = ssub.s32 1, %s6
  %s9 = scalar_select 0, %s8, %s6
  $region1: #{tpu_custom_call.1} parent=0
    #allocation2 [shape = 'u8[131072]{0}', space=vmem, size = 0x20000, scoped, tag = 'output window, operand 0']
    #allocation3 [shape = 's32[2]{0}', space=sflag, size = 0x8, scoped, tag = 'scoped memory for tpu_custom_call.1']
    %10 = vsyncpa [#allocation3], 0
    %s11 = scalar_lea.sflag [#allocation3], 1
    %12 = vsyncpa %s11, 0
    loop: start=0, step=1, limit=6
    $region2: #{tpu_custom_call.1} parent=1 // loop_pre_header
      _
    $region3: #{tpu_custom_call.1} parent=1 // loop_header
      %s14 = sphi 0, %s18
      %p15 = scmp.ge.s32.totalorder %s14, 6
      %s21 = sphi 0, %s33
      %s22 = sphi 0, %s29
      %s23 = sphi 0, %s21
      %s24 = sphi 0, %s22
      %s25 = sphi 0, %s23
      %s26 = sphi 0, %s24
      %s36 = sphi 0, %s38
      %s39 = sphi 0, %s36
      %s40 = sphi 0, %s39
      %s56 = sphi 0, %s40
      %s60 = sphi 0, %s60
      %s62 = sphi 0, %s60
      %s63 = sphi 0, %s62
      %s77 = sphi 0, %s63
      %s81 = sphi 0, %s81
      %s83 = sphi 0, %s81
      %s84 = sphi 0, %s83
      %s98 = sphi 0, %s84
      %s102 = sphi 0, %s102
      %s104 = sphi 0, %s102
      %s105 = sphi 0, %s104
      %s119 = sphi 0, %s105
      %s123 = sphi 0, %s123
      %s125 = sphi 0, %s123
      %s126 = sphi 0, %s125
      %s140 = sphi 0, %s126
      %s148 = sphi 0, %s150
      %s151 = sphi 0, %s148
      %s152 = sphi 0, %s151
      %s168 = sphi 0, %s152
    $region4: #{tpu_custom_call.1} parent=1 // loop_header_branch
      %17 = sbr.rel (%p15) target = $region8
    $region5: #{tpu_custom_call.1} parent=1 // loop_body
      %s19 = ssub.s32 %s14, 1
      %s20 = ssub.s32 %s14, 2
      %s27 = sadd.s32 1, %s22
      %p28 = scmp.ge.s32.totalorder %s27, 2
      %s29 = scalar_select %p28, 0, %s27
      %s30 = sadd.s32 1, %s21
      %s31 = scalar_select %p28, %s30, %s21
      %p32 = scmp.ge.s32.totalorder %s31, 2
      %s33 = scalar_select %p32, 0, %s31
      %s34 = ssub.s32 %s21, %s33
      %p35 = scmp.eq.s32.totalorder %s34, 0
      %s37 = sadd.s32 %s36, 1
      %s38 = scalar_select %p35, %s36, %s37
      %p41 = pneg %p35
      %p42 = scmp.eq.s32.totalorder %s14, 3
      %p43 = por %p41, %p42
      %p44 = scmp.ne.s32.totalorder %s36, %s39
      %p45 = scmp.eq.s32.totalorder %s14, 0
      %p46 = por %p44, %p45
      %p47 = scmp.ne.s32.totalorder %s36, %s39
      %p48 = scmp.eq.s32.totalorder %s19, 3
      %p49 = por %p47, %p48
      %p50 = scmp.ne.s32.totalorder %s39, %s40
      %p51 = scmp.eq.s32.totalorder %s19, 0
      %p52 = por %p50, %p51
      %p53 = scmp.ne.s32.totalorder %s39, %s40
      %p54 = scmp.eq.s32.totalorder %s20, 3
      %p55 = por %p53, %p54
      %p57 = scmp.ne.s32.totalorder %s40, %s56
      %p58 = scmp.eq.s32.totalorder %s20, 0
      %p59 = por %p57, %p58
      %s61 = sadd.s32 %s60, 1
      %p64 = scmp.eq.s32.totalorder %s14, 3
      %p65 = scmp.ne.s32.totalorder %s60, %s62
      %p66 = scmp.eq.s32.totalorder %s14, 0
      %p67 = por %p65, %p66
      %p68 = scmp.ne.s32.totalorder %s60, %s62
      %p69 = scmp.eq.s32.totalorder %s19, 3
      %p70 = por %p68, %p69
      %p71 = scmp.ne.s32.totalorder %s62, %s63
      %p72 = scmp.eq.s32.totalorder %s19, 0
      %p73 = por %p71, %p72
      %p74 = scmp.ne.s32.totalorder %s62, %s63
      %p75 = scmp.eq.s32.totalorder %s20, 3
      %p76 = por %p74, %p75
      %p78 = scmp.ne.s32.totalorder %s63, %s77
      %p79 = scmp.eq.s32.totalorder %s20, 0
      %p80 = por %p78, %p79
      %s82 = sadd.s32 %s81, 1
      %p85 = scmp.eq.s32.totalorder %s14, 3
      %p86 = scmp.ne.s32.totalorder %s81, %s83
      %p87 = scmp.eq.s32.totalorder %s14, 0
      %p88 = por %p86, %p87
      %p89 = scmp.ne.s32.totalorder %s81, %s83
      %p90 = scmp.eq.s32.totalorder %s19, 3
      %p91 = por %p89, %p90
      %p92 = scmp.ne.s32.totalorder %s83, %s84
      %p93 = scmp.eq.s32.totalorder %s19, 0
      %p94 = por %p92, %p93
      %p95 = scmp.ne.s32.totalorder %s83, %s84
      %p96 = scmp.eq.s32.totalorder %s20, 3
      %p97 = por %p95, %p96
      %p99 = scmp.ne.s32.totalorder %s84, %s98
      %p100 = scmp.eq.s32.totalorder %s20, 0
      %p101 = por %p99, %p100
      %s103 = sadd.s32 %s102, 1
      %p106 = scmp.eq.s32.totalorder %s14, 3
      %p107 = scmp.ne.s32.totalorder %s102, %s104
      %p108 = scmp.eq.s32.totalorder %s14, 0
      %p109 = por %p107, %p108
      %p110 = scmp.ne.s32.totalorder %s102, %s104
      %p111 = scmp.eq.s32.totalorder %s19, 3
      %p112 = por %p110, %p111
      %p113 = scmp.ne.s32.totalorder %s104, %s105
      %p114 = scmp.eq.s32.totalorder %s19, 0
      %p115 = por %p113, %p114
      %p116 = scmp.ne.s32.totalorder %s104, %s105
      %p117 = scmp.eq.s32.totalorder %s20, 3
      %p118 = por %p116, %p117
      %p120 = scmp.ne.s32.totalorder %s105, %s119
      %p121 = scmp.eq.s32.totalorder %s20, 0
      %p122 = por %p120, %p121
      %s124 = sadd.s32 %s123, 1
      %p127 = scmp.eq.s32.totalorder %s14, 3
      %p128 = scmp.ne.s32.totalorder %s123, %s125
      %p129 = scmp.eq.s32.totalorder %s14, 0
      %p130 = por %p128, %p129
      %p131 = scmp.ne.s32.totalorder %s123, %s125
      %p132 = scmp.eq.s32.totalorder %s19, 3
      %p133 = por %p131, %p132
      %p134 = scmp.ne.s32.totalorder %s125, %s126
      %p135 = scmp.eq.s32.totalorder %s19, 0
      %p136 = por %p134, %p135
      %p137 = scmp.ne.s32.totalorder %s125, %s126
      %p138 = scmp.eq.s32.totalorder %s20, 3
      %p139 = por %p137, %p138
      %p141 = scmp.ne.s32.totalorder %s126, %s140
      %p142 = scmp.eq.s32.totalorder %s20, 0
      %p143 = por %p141, %p142
      %s144 = ssub.s32 %s21, %s33
      %s145 = ssub.s32 %s22, %s29
      %s146 = sor.u32 %s144, %s145
      %p147 = scmp.eq.s32.totalorder %s146, 0
      %s149 = sadd.s32 %s148, 1
      %s150 = scalar_select %p147, %s148, %s149
      %p153 = pneg %p147
      %p154 = scmp.eq.s32.totalorder %s14, 3
      %p155 = por %p153, %p154
      %p156 = scmp.ne.s32.totalorder %s148, %s151
      %p157 = scmp.eq.s32.totalorder %s14, 0
      %p158 = por %p156, %p157
      %p159 = scmp.ne.s32.totalorder %s148, %s151
      %p160 = scmp.eq.s32.totalorder %s19, 3
      %p161 = por %p159, %p160
      %p162 = scmp.ne.s32.totalorder %s151, %s152
      %p163 = scmp.eq.s32.totalorder %s19, 0
      %p164 = por %p162, %p163
      %p165 = scmp.ne.s32.totalorder %s151, %s152
      %p166 = scmp.eq.s32.totalorder %s20, 3
      %p167 = por %p165, %p166
      %p169 = scmp.ne.s32.totalorder %s152, %s168
      %p170 = scmp.eq.s32.totalorder %s20, 0
      %p171 = por %p169, %p170
      %p172 = scmp.le.s32.totalorder 1, %s14
      %p173 = scmp.lt.s32.totalorder %s14, 5
      %p174 = pnand %p172, %p173
      %p175 = pneg %p174
      // Predicated region
      $region9: #{tpu_custom_call.1} parent=5 // pred_check
        _
      $region10: #{tpu_custom_call.1} parent=5 // pred_check_branch
        %177 = sbr.rel (%p174) target = $region12
      $region11: #{tpu_custom_call.1} parent=5 // pred_region
        %s178 = ssub.s32 %s14, 1
        // Predicated region
        $region13: #{tpu_custom_call.1} parent=11 // pred_check
          %p179 = pneg %p73
        $region14: #{tpu_custom_call.1} parent=11 // pred_check_branch
          %181 = sbr.rel (%p179) target = $region16
        $region15: #{tpu_custom_call.1} parent=11 // pred_region
          _
        $region16: #{tpu_custom_call.1} parent=11 // pred_fallthru
          _
        // Predicated region
        $region17: #{tpu_custom_call.1} parent=11 // pred_check
          %p182 = pneg %p94
        $region18: #{tpu_custom_call.1} parent=11 // pred_check_branch
          %184 = sbr.rel (%p182) target = $region20
        $region19: #{tpu_custom_call.1} parent=11 // pred_region
          _
        $region20: #{tpu_custom_call.1} parent=11 // pred_fallthru
          _
        // Predicated region
        $region21: #{tpu_custom_call.1} parent=11 // pred_check
          %p185 = pneg %p115
        $region22: #{tpu_custom_call.1} parent=11 // pred_check_branch
          %187 = sbr.rel (%p185) target = $region24
        $region23: #{tpu_custom_call.1} parent=11 // pred_region
          _
        $region24: #{tpu_custom_call.1} parent=11 // pred_fallthru
          _
        // Predicated region
        $region25: #{tpu_custom_call.1} parent=11 // pred_check
          %p188 = pneg %p136
        $region26: #{tpu_custom_call.1} parent=11 // pred_check_branch
          %190 = sbr.rel (%p188) target = $region28
        $region27: #{tpu_custom_call.1} parent=11 // pred_region
          _
        $region28: #{tpu_custom_call.1} parent=11 // pred_fallthru
          _
      $region12: #{tpu_custom_call.1} parent=5 // pred_fallthru
        _
      %p191 = scmp.lt.s32.totalorder %s14, 4
      // Predicated region
      $region29: #{tpu_custom_call.1} parent=5 // pred_check
        %p192 = pneg %p191
      $region30: #{tpu_custom_call.1} parent=5 // pred_check_branch
        %194 = sbr.rel (%p192) target = $region32
      $region31: #{tpu_custom_call.1} parent=5 // pred_region
        // Predicated region
        $region33: #{tpu_custom_call.1} parent=31 // pred_check
          %p195 = pneg %p46
        $region34: #{tpu_custom_call.1} parent=31 // pred_check_branch
          %197 = sbr.rel (%p195) target = $region36
        $region35: #{tpu_custom_call.1} parent=31 // pred_region
          %p198 = scmp.lt.s32.totalorder %s21, 1
          %s199 = scalar_select %p198, %s21, 1
          %s200 = smul.addr %s199, 54
          %s201 = smul.addr %s200, 8
          %s202 = scalar_lea.vmem %s0, %s201
        $region36: #{tpu_custom_call.1} parent=31 // pred_fallthru
          _
      $region32: #{tpu_custom_call.1} parent=5 // pred_fallthru
        _
      %p203 = scmp.le.s32.totalorder 1, %s14
      %p204 = scmp.lt.s32.totalorder %s14, 5
      %p205 = pnand %p203, %p204
      %p206 = pneg %p205
      // Predicated region
      $region37: #{tpu_custom_call.1} parent=5 // pred_check
        _
      $region38: #{tpu_custom_call.1} parent=5 // pred_check_branch
        %208 = sbr.rel (%p205) target = $region40
      $region39: #{tpu_custom_call.1} parent=5 // pred_region
        %s209 = ssub.s32 %s14, 1
        %p210 = scmp.lt.s32.totalorder %s23, 1
        %s211 = scalar_select %p210, %s23, 1
        %s212 = smul.addr %s211, 54
        %s213 = smul.addr %s212, 8
        %s214 = scalar_lea.vmem %s0, %s213
        %p215 = pneg %p52
        %p216 = pneg %p49
        %p217 = pneg %p73
        %p218 = pneg %p70
        %p219 = pneg %p94
        %p220 = pneg %p91
        %p221 = pneg %p115
        %p222 = pneg %p112
        %p223 = pneg %p136
        %p224 = pneg %p133
        %p225 = pneg %p164
        %p226 = pneg %p161
        %s227 = sand.u32 %s151, 1
        %s228 = scalar_lea.sflag [#allocation3], %s227
        %s229 = sand.u32 %s151, 1
        %s230 = smul.addr %s229, 128
        %s231 = scalar_lea.vmem [#allocation2], %s230
        %p232 = scmp.lt.s32.totalorder %s23, 1
        %s233 = scalar_select %p232, %s23, 1
        %s234 = smul.addr %s233, 54
        %s235 = smul.addr %s234, 8
        %s236 = scalar_lea.vmem %s0, %s235
        %s237 = smul.u32 8, %s24
        %s238 = smul.u32 %s24, 8
        %s239 = smul.u32 %s238, 24
        %s240 = scalar_lea.vmem %s236, %s239
        %v241 = vld [vmem:[%s240] sm:$0xff]
        %v242 = vld [vmem:[%s240 + $0x8] sm:$0xff]
        %v243 = vld [vmem:[%s240 + $0x18] sm:$0xff]
        %v244 = vld [vmem:[%s240 + $0x20] sm:$0xff]
        %v245 = vld [vmem:[%s240 + $0x30] sm:$0xff]
        %v246 = vld [vmem:[%s240 + $0x38] sm:$0xff]
        %v247 = vld [vmem:[%s240 + $0x48] sm:$0xff]
        %v248 = vld [vmem:[%s240 + $0x50] sm:$0xff]
        %v249 = vld [vmem:[%s240 + $0x60] sm:$0xff]
        %v250 = vld [vmem:[%s240 + $0x68] sm:$0xff]
        %v251 = vld [vmem:[%s240 + $0x78] sm:$0xff]
        %v252 = vld [vmem:[%s240 + $0x80] sm:$0xff]
        %v253 = vld [vmem:[%s240 + $0x90] sm:$0xff]
        %v254 = vld [vmem:[%s240 + $0x98] sm:$0xff]
        %v255 = vld [vmem:[%s240 + $0xa8] sm:$0xff]
        %v256 = vld [vmem:[%s240 + $0xb0] sm:$0xff]
        %v257 = vld [vmem:[%s1] sm:$0x1]
        %v258 = vlaneseq
        %v259 = vshrl.u32 %v258, 7
        %v260 = vsub.s32 0, %v259
        %v261 = vrot.slane %v257, %v260
        %v262 = vmul.f32 %v241, %v261
        %v263 = vmul.f32 %v242, %v261
        %v264 = vmul.f32 %v243, %v261
        %v265 = vmul.f32 %v244, %v261
        %v266 = vmul.f32 %v245, %v261
        %v267 = vmul.f32 %v246, %v261
        %v268 = vmul.f32 %v247, %v261
        %v269 = vmul.f32 %v248, %v261
        %v270 = vmul.f32 %v249, %v261
        %v271 = vmul.f32 %v250, %v261
        %v272 = vmul.f32 %v251, %v261
        %v273 = vmul.f32 %v252, %v261
        %v274 = vmul.f32 %v253, %v261
        %v275 = vmul.f32 %v254, %v261
        %v276 = vmul.f32 %v255, %v261
        %v277 = vmul.f32 %v256, %v261
        %v278 = vadd.f32 %v262, 0.0
        %v279 = vadd.f32 %v263, 0.0
        %v280 = vadd.f32 %v264, 0.0
        %v281 = vadd.f32 %v265, 0.0
        %v282 = vadd.f32 %v266, 0.0
        %v283 = vadd.f32 %v267, 0.0
        %v284 = vadd.f32 %v268, 0.0
        %v285 = vadd.f32 %v269, 0.0
        %v286 = vadd.f32 %v270, 0.0
        %v287 = vadd.f32 %v271, 0.0
        %v288 = vadd.f32 %v272, 0.0
        %v289 = vadd.f32 %v273, 0.0
        %v290 = vadd.f32 %v274, 0.0
        %v291 = vadd.f32 %v275, 0.0
        %v292 = vadd.f32 %v276, 0.0
        %v293 = vadd.f32 %v277, 0.0
        %v294 = vld [vmem:[%s240 + $0x1] sm:$0xff]
        %v295 = vld [vmem:[%s240 + $0x9] sm:$0xff]
        %v296 = vld [vmem:[%s240 + $0x19] sm:$0xff]
        %v297 = vld [vmem:[%s240 + $0x21] sm:$0xff]
        %v298 = vld [vmem:[%s240 + $0x31] sm:$0xff]
        %v299 = vld [vmem:[%s240 + $0x39] sm:$0xff]
        %v300 = vld [vmem:[%s240 + $0x49] sm:$0xff]
        %v301 = vld [vmem:[%s240 + $0x51] sm:$0xff]
        %v302 = vld [vmem:[%s240 + $0x61] sm:$0xff]
        %v303 = vld [vmem:[%s240 + $0x69] sm:$0xff]
        %v304 = vld [vmem:[%s240 + $0x79] sm:$0xff]
        %v305 = vld [vmem:[%s240 + $0x81] sm:$0xff]
        %v306 = vld [vmem:[%s240 + $0x91] sm:$0xff]
        %v307 = vld [vmem:[%s240 + $0x99] sm:$0xff]
        %v308 = vld [vmem:[%s240 + $0xa9] sm:$0xff]
        %v309 = vld [vmem:[%s240 + $0xb1] sm:$0xff]
        %v310 = vld [vmem:[%s1 + $0x1] sm:$0x1]
        %v311 = vlaneseq
        %v312 = vshrl.u32 %v311, 7
        %v313 = vsub.s32 0, %v312
        %v314 = vrot.slane %v310, %v313
        %v315 = vmul.f32 %v294, %v314
        %v316 = vmul.f32 %v295, %v314
        %v317 = vmul.f32 %v296, %v314
        %v318 = vmul.f32 %v297, %v314
        %v319 = vmul.f32 %v298, %v314
        %v320 = vmul.f32 %v299, %v314
        %v321 = vmul.f32 %v300, %v314
        %v322 = vmul.f32 %v301, %v314
        %v323 = vmul.f32 %v302, %v314
        %v324 = vmul.f32 %v303, %v314
        %v325 = vmul.f32 %v304, %v314
        %v326 = vmul.f32 %v305, %v314
        %v327 = vmul.f32 %v306, %v314
        %v328 = vmul.f32 %v307, %v314
        %v329 = vmul.f32 %v308, %v314
        %v330 = vmul.f32 %v309, %v314
        %v331 = vadd.f32 %v278, %v315
        %v332 = vadd.f32 %v279, %v316
        %v333 = vadd.f32 %v280, %v317
        %v334 = vadd.f32 %v281, %v318
        %v335 = vadd.f32 %v282, %v319
        %v336 = vadd.f32 %v283, %v320
        %v337 = vadd.f32 %v284, %v321
        %v338 = vadd.f32 %v285, %v322
        %v339 = vadd.f32 %v286, %v323
        %v340 = vadd.f32 %v287, %v324
        %v341 = vadd.f32 %v288, %v325
        %v342 = vadd.f32 %v289, %v326
        %v343 = vadd.f32 %v290, %v327
        %v344 = vadd.f32 %v291, %v328
        %v345 = vadd.f32 %v292, %v329
        %v346 = vadd.f32 %v293, %v330
        %v347 = vld [vmem:[%s240 + $0x2] sm:$0xff]
        %v348 = vld [vmem:[%s240 + $0xa] sm:$0xff]
        %v349 = vld [vmem:[%s240 + $0x1a] sm:$0xff]
        %v350 = vld [vmem:[%s240 + $0x22] sm:$0xff]
        %v351 = vld [vmem:[%s240 + $0x32] sm:$0xff]
        %v352 = vld [vmem:[%s240 + $0x3a] sm:$0xff]
        %v353 = vld [vmem:[%s240 + $0x4a] sm:$0xff]
        %v354 = vld [vmem:[%s240 + $0x52] sm:$0xff]
        %v355 = vld [vmem:[%s240 + $0x62] sm:$0xff]
        %v356 = vld [vmem:[%s240 + $0x6a] sm:$0xff]
        %v357 = vld [vmem:[%s240 + $0x7a] sm:$0xff]
        %v358 = vld [vmem:[%s240 + $0x82] sm:$0xff]
        %v359 = vld [vmem:[%s240 + $0x92] sm:$0xff]
        %v360 = vld [vmem:[%s240 + $0x9a] sm:$0xff]
        %v361 = vld [vmem:[%s240 + $0xaa] sm:$0xff]
        %v362 = vld [vmem:[%s240 + $0xb2] sm:$0xff]
        %v363 = vld [vmem:[%s1 + $0x2] sm:$0x1]
        %v364 = vlaneseq
        %v365 = vshrl.u32 %v364, 7
        %v366 = vsub.s32 0, %v365
        %v367 = vrot.slane %v363, %v366
        %v368 = vmul.f32 %v347, %v367
        %v369 = vmul.f32 %v348, %v367
        %v370 = vmul.f32 %v349, %v367
        %v371 = vmul.f32 %v350, %v367
        %v372 = vmul.f32 %v351, %v367
        %v373 = vmul.f32 %v352, %v367
        %v374 = vmul.f32 %v353, %v367
        %v375 = vmul.f32 %v354, %v367
        %v376 = vmul.f32 %v355, %v367
        %v377 = vmul.f32 %v356, %v367
        %v378 = vmul.f32 %v357, %v367
        %v379 = vmul.f32 %v358, %v367
        %v380 = vmul.f32 %v359, %v367
        %v381 = vmul.f32 %v360, %v367
        %v382 = vmul.f32 %v361, %v367
        %v383 = vmul.f32 %v362, %v367
        %v384 = vadd.f32 %v331, %v368
        %v385 = vadd.f32 %v332, %v369
        %v386 = vadd.f32 %v333, %v370
        %v387 = vadd.f32 %v334, %v371
        %v388 = vadd.f32 %v335, %v372
        %v389 = vadd.f32 %v336, %v373
        %v390 = vadd.f32 %v337, %v374
        %v391 = vadd.f32 %v338, %v375
        %v392 = vadd.f32 %v339, %v376
        %v393 = vadd.f32 %v340, %v377
        %v394 = vadd.f32 %v341, %v378
        %v395 = vadd.f32 %v342, %v379
        %v396 = vadd.f32 %v343, %v380
        %v397 = vadd.f32 %v344, %v381
        %v398 = vadd.f32 %v345, %v382
        %v399 = vadd.f32 %v346, %v383
        %s400 = sadd.s32 %s238, 1
        %s401 = smul.u32 %s400, 24
        %s402 = scalar_lea.vmem %s236, %s401
        %v403 = vld [vmem:[%s402] sm:$0xff]
        %v404 = vld [vmem:[%s402 + $0x8] sm:$0xff]
        %v405 = vld [vmem:[%s402 + $0x18] sm:$0xff]
        %v406 = vld [vmem:[%s402 + $0x20] sm:$0xff]
        %v407 = vld [vmem:[%s402 + $0x30] sm:$0xff]
        %v408 = vld [vmem:[%s402 + $0x38] sm:$0xff]
        %v409 = vld [vmem:[%s402 + $0x48] sm:$0xff]
        %v410 = vld [vmem:[%s402 + $0x50] sm:$0xff]
        %v411 = vld [vmem:[%s402 + $0x60] sm:$0xff]
        %v412 = vld [vmem:[%s402 + $0x68] sm:$0xff]
        %v413 = vld [vmem:[%s402 + $0x78] sm:$0xff]
        %v414 = vld [vmem:[%s402 + $0x80] sm:$0xff]
        %v415 = vld [vmem:[%s402 + $0x90] sm:$0xff]
        %v416 = vld [vmem:[%s402 + $0x98] sm:$0xff]
        %v417 = vld [vmem:[%s402 + $0xa8] sm:$0xff]
        %v418 = vld [vmem:[%s402 + $0xb0] sm:$0xff]
        %s419 = scalar_lea.vmem %s1, 4
        %v420 = vld [vmem:[%s419] sm:$0x1]
        %v421 = vlaneseq
        %v422 = vshrl.u32 %v421, 7
        %v423 = vsub.s32 0, %v422
        %v424 = vrot.slane %v420, %v423
        %v425 = vmul.f32 %v403, %v424
        %v426 = vmul.f32 %v404, %v424
        %v427 = vmul.f32 %v405, %v424
        %v428 = vmul.f32 %v406, %v424
        %v429 = vmul.f32 %v407, %v424
        %v430 = vmul.f32 %v408, %v424
        %v431 = vmul.f32 %v409, %v424
        %v432 = vmul.f32 %v410, %v424
        %v433 = vmul.f32 %v411, %v424
        %v434 = vmul.f32 %v412, %v424
        %v435 = vmul.f32 %v413, %v424
        %v436 = vmul.f32 %v414, %v424
        %v437 = vmul.f32 %v415, %v424
        %v438 = vmul.f32 %v416, %v424
        %v439 = vmul.f32 %v417, %v424
        %v440 = vmul.f32 %v418, %v424
        %v441 = vadd.f32 %v384, %v425
        %v442 = vadd.f32 %v385, %v426
        %v443 = vadd.f32 %v386, %v427
        %v444 = vadd.f32 %v387, %v428
        %v445 = vadd.f32 %v388, %v429
        %v446 = vadd.f32 %v389, %v430
        %v447 = vadd.f32 %v390, %v431
        %v448 = vadd.f32 %v391, %v432
        %v449 = vadd.f32 %v392, %v433
        %v450 = vadd.f32 %v393, %v434
        %v451 = vadd.f32 %v394, %v435
        %v452 = vadd.f32 %v395, %v436
        %v453 = vadd.f32 %v396, %v437
        %v454 = vadd.f32 %v397, %v438
        %v455 = vadd.f32 %v398, %v439
        %v456 = vadd.f32 %v399, %v440
        %v457 = vld [vmem:[%s402 + $0x1] sm:$0xff]
        %v458 = vld [vmem:[%s402 + $0x9] sm:$0xff]
        %v459 = vld [vmem:[%s402 + $0x19] sm:$0xff]
        %v460 = vld [vmem:[%s402 + $0x21] sm:$0xff]
        %v461 = vld [vmem:[%s402 + $0x31] sm:$0xff]
        %v462 = vld [vmem:[%s402 + $0x39] sm:$0xff]
        %v463 = vld [vmem:[%s402 + $0x49] sm:$0xff]
        %v464 = vld [vmem:[%s402 + $0x51] sm:$0xff]
        %v465 = vld [vmem:[%s402 + $0x61] sm:$0xff]
        %v466 = vld [vmem:[%s402 + $0x69] sm:$0xff]
        %v467 = vld [vmem:[%s402 + $0x79] sm:$0xff]
        %v468 = vld [vmem:[%s402 + $0x81] sm:$0xff]
        %v469 = vld [vmem:[%s402 + $0x91] sm:$0xff]
        %v470 = vld [vmem:[%s402 + $0x99] sm:$0xff]
        %v471 = vld [vmem:[%s402 + $0xa9] sm:$0xff]
        %v472 = vld [vmem:[%s402 + $0xb1] sm:$0xff]
        %v473 = vld [vmem:[%s419 + $0x1] sm:$0x1]
        %v474 = vlaneseq
        %v475 = vshrl.u32 %v474, 7
        %v476 = vsub.s32 0, %v475
        %v477 = vrot.slane %v473, %v476
        %v478 = vmul.f32 %v457, %v477
        %v479 = vmul.f32 %v458, %v477
        %v480 = vmul.f32 %v459, %v477
        %v481 = vmul.f32 %v460, %v477
        %v482 = vmul.f32 %v461, %v477
        %v483 = vmul.f32 %v462, %v477
        %v484 = vmul.f32 %v463, %v477
        %v485 = vmul.f32 %v464, %v477
        %v486 = vmul.f32 %v465, %v477
        %v487 = vmul.f32 %v466, %v477
        %v488 = vmul.f32 %v467, %v477
        %v489 = vmul.f32 %v468, %v477
        %v490 = vmul.f32 %v469, %v477
        %v491 = vmul.f32 %v470, %v477
        %v492 = vmul.f32 %v471, %v477
        %v493 = vmul.f32 %v472, %v477
        %v494 = vadd.f32 %v441, %v478
        %v495 = vadd.f32 %v442, %v479
        %v496 = vadd.f32 %v443, %v480
        %v497 = vadd.f32 %v444, %v481
        %v498 = vadd.f32 %v445, %v482
        %v499 = vadd.f32 %v446, %v483
        %v500 = vadd.f32 %v447, %v484
        %v501 = vadd.f32 %v448, %v485
        %v502 = vadd.f32 %v449, %v486
        %v503 = vadd.f32 %v450, %v487
        %v504 = vadd.f32 %v451, %v488
        %v505 = vadd.f32 %v452, %v489
        %v506 = vadd.f32 %v453, %v490
        %v507 = vadd.f32 %v454, %v491
        %v508 = vadd.f32 %v455, %v492
        %v509 = vadd.f32 %v456, %v493
        %v510 = vld [vmem:[%s402 + $0x2] sm:$0xff]
        %v511 = vld [vmem:[%s402 + $0xa] sm:$0xff]
        %v512 = vld [vmem:[%s402 + $0x1a] sm:$0xff]
        %v513 = vld [vmem:[%s402 + $0x22] sm:$0xff]
        %v514 = vld [vmem:[%s402 + $0x32] sm:$0xff]
        %v515 = vld [vmem:[%s402 + $0x3a] sm:$0xff]
        %v516 = vld [vmem:[%s402 + $0x4a] sm:$0xff]
        %v517 = vld [vmem:[%s402 + $0x52] sm:$0xff]
        %v518 = vld [vmem:[%s402 + $0x62] sm:$0xff]
        %v519 = vld [vmem:[%s402 + $0x6a] sm:$0xff]
        %v520 = vld [vmem:[%s402 + $0x7a] sm:$0xff]
        %v521 = vld [vmem:[%s402 + $0x82] sm:$0xff]
        %v522 = vld [vmem:[%s402 + $0x92] sm:$0xff]
        %v523 = vld [vmem:[%s402 + $0x9a] sm:$0xff]
        %v524 = vld [vmem:[%s402 + $0xaa] sm:$0xff]
        %v525 = vld [vmem:[%s402 + $0xb2] sm:$0xff]
        %v526 = vld [vmem:[%s419 + $0x2] sm:$0x1]
        %v527 = vlaneseq
        %v528 = vshrl.u32 %v527, 7
        %v529 = vsub.s32 0, %v528
        %v530 = vrot.slane %v526, %v529
        %v531 = vmul.f32 %v510, %v530
        %v532 = vmul.f32 %v511, %v530
        %v533 = vmul.f32 %v512, %v530
        %v534 = vmul.f32 %v513, %v530
        %v535 = vmul.f32 %v514, %v530
        %v536 = vmul.f32 %v515, %v530
        %v537 = vmul.f32 %v516, %v530
        %v538 = vmul.f32 %v517, %v530
        %v539 = vmul.f32 %v518, %v530
        %v540 = vmul.f32 %v519, %v530
        %v541 = vmul.f32 %v520, %v530
        %v542 = vmul.f32 %v521, %v530
        %v543 = vmul.f32 %v522, %v530
        %v544 = vmul.f32 %v523, %v530
        %v545 = vmul.f32 %v524, %v530
        %v546 = vmul.f32 %v525, %v530
        %v547 = vadd.f32 %v494, %v531
        %v548 = vadd.f32 %v495, %v532
        %v549 = vadd.f32 %v496, %v533
        %v550 = vadd.f32 %v497, %v534
        %v551 = vadd.f32 %v498, %v535
        %v552 = vadd.f32 %v499, %v536
        %v553 = vadd.f32 %v500, %v537
        %v554 = vadd.f32 %v501, %v538
        %v555 = vadd.f32 %v502, %v539
        %v556 = vadd.f32 %v503, %v540
        %v557 = vadd.f32 %v504, %v541
        %v558 = vadd.f32 %v505, %v542
        %v559 = vadd.f32 %v506, %v543
        %v560 = vadd.f32 %v507, %v544
        %v561 = vadd.f32 %v508, %v545
        %v562 = vadd.f32 %v509, %v546
        %s563 = sadd.s32 %s238, 2
        %s564 = smul.u32 %s563, 24
        %s565 = scalar_lea.vmem %s236, %s564
        %v566 = vld [vmem:[%s565] sm:$0xff]
        %v567 = vld [vmem:[%s565 + $0x8] sm:$0xff]
        %v568 = vld [vmem:[%s565 + $0x18] sm:$0xff]
        %v569 = vld [vmem:[%s565 + $0x20] sm:$0xff]
        %v570 = vld [vmem:[%s565 + $0x30] sm:$0xff]
        %v571 = vld [vmem:[%s565 + $0x38] sm:$0xff]
        %v572 = vld [vmem:[%s565 + $0x48] sm:$0xff]
        %v573 = vld [vmem:[%s565 + $0x50] sm:$0xff]
        %v574 = vld [vmem:[%s565 + $0x60] sm:$0xff]
        %v575 = vld [vmem:[%s565 + $0x68] sm:$0xff]
        %v576 = vld [vmem:[%s565 + $0x78] sm:$0xff]
        %v577 = vld [vmem:[%s565 + $0x80] sm:$0xff]
        %v578 = vld [vmem:[%s565 + $0x90] sm:$0xff]
        %v579 = vld [vmem:[%s565 + $0x98] sm:$0xff]
        %v580 = vld [vmem:[%s565 + $0xa8] sm:$0xff]
        %v581 = vld [vmem:[%s565 + $0xb0] sm:$0xff]
        %s582 = scalar_lea.vmem %s1, 8
        %v583 = vld [vmem:[%s582] sm:$0x1]
        %v584 = vlaneseq
        %v585 = vshrl.u32 %v584, 7
        %v586 = vsub.s32 0, %v585
        %v587 = vrot.slane %v583, %v586
        %v588 = vmul.f32 %v566, %v587
        %v589 = vmul.f32 %v567, %v587
        %v590 = vmul.f32 %v568, %v587
        %v591 = vmul.f32 %v569, %v587
        %v592 = vmul.f32 %v570, %v587
        %v593 = vmul.f32 %v571, %v587
        %v594 = vmul.f32 %v572, %v587
        %v595 = vmul.f32 %v573, %v587
        %v596 = vmul.f32 %v574, %v587
        %v597 = vmul.f32 %v575, %v587
        %v598 = vmul.f32 %v576, %v587
        %v599 = vmul.f32 %v577, %v587
        %v600 = vmul.f32 %v578, %v587
        %v601 = vmul.f32 %v579, %v587
        %v602 = vmul.f32 %v580, %v587
        %v603 = vmul.f32 %v581, %v587
        %v604 = vadd.f32 %v547, %v588
        %v605 = vadd.f32 %v548, %v589
        %v606 = vadd.f32 %v549, %v590
        %v607 = vadd.f32 %v550, %v591
        %v608 = vadd.f32 %v551, %v592
        %v609 = vadd.f32 %v552, %v593
        %v610 = vadd.f32 %v553, %v594
        %v611 = vadd.f32 %v554, %v595
        %v612 = vadd.f32 %v555, %v596
        %v613 = vadd.f32 %v556, %v597
        %v614 = vadd.f32 %v557, %v598
        %v615 = vadd.f32 %v558, %v599
        %v616 = vadd.f32 %v559, %v600
        %v617 = vadd.f32 %v560, %v601
        %v618 = vadd.f32 %v561, %v602
        %v619 = vadd.f32 %v562, %v603
        %v620 = vld [vmem:[%s565 + $0x1] sm:$0xff]
        %v621 = vld [vmem:[%s565 + $0x9] sm:$0xff]
        %v622 = vld [vmem:[%s565 + $0x19] sm:$0xff]
        %v623 = vld [vmem:[%s565 + $0x21] sm:$0xff]
        %v624 = vld [vmem:[%s565 + $0x31] sm:$0xff]
        %v625 = vld [vmem:[%s565 + $0x39] sm:$0xff]
        %v626 = vld [vmem:[%s565 + $0x49] sm:$0xff]
        %v627 = vld [vmem:[%s565 + $0x51] sm:$0xff]
        %v628 = vld [vmem:[%s565 + $0x61] sm:$0xff]
        %v629 = vld [vmem:[%s565 + $0x69] sm:$0xff]
        %v630 = vld [vmem:[%s565 + $0x79] sm:$0xff]
        %v631 = vld [vmem:[%s565 + $0x81] sm:$0xff]
        %v632 = vld [vmem:[%s565 + $0x91] sm:$0xff]
        %v633 = vld [vmem:[%s565 + $0x99] sm:$0xff]
        %v634 = vld [vmem:[%s565 + $0xa9] sm:$0xff]
        %v635 = vld [vmem:[%s565 + $0xb1] sm:$0xff]
        %v636 = vld [vmem:[%s582 + $0x1] sm:$0x1]
        %v637 = vlaneseq
        %v638 = vshrl.u32 %v637, 7
        %v639 = vsub.s32 0, %v638
        %v640 = vrot.slane %v636, %v639
        %v641 = vmul.f32 %v620, %v640
        %v642 = vmul.f32 %v621, %v640
        %v643 = vmul.f32 %v622, %v640
        %v644 = vmul.f32 %v623, %v640
        %v645 = vmul.f32 %v624, %v640
        %v646 = vmul.f32 %v625, %v640
        %v647 = vmul.f32 %v626, %v640
        %v648 = vmul.f32 %v627, %v640
        %v649 = vmul.f32 %v628, %v640
        %v650 = vmul.f32 %v629, %v640
        %v651 = vmul.f32 %v630, %v640
        %v652 = vmul.f32 %v631, %v640
        %v653 = vmul.f32 %v632, %v640
        %v654 = vmul.f32 %v633, %v640
        %v655 = vmul.f32 %v634, %v640
        %v656 = vmul.f32 %v635, %v640
        %v657 = vadd.f32 %v604, %v641
        %v658 = vadd.f32 %v605, %v642
        %v659 = vadd.f32 %v606, %v643
        %v660 = vadd.f32 %v607, %v644
        %v661 = vadd.f32 %v608, %v645
        %v662 = vadd.f32 %v609, %v646
        %v663 = vadd.f32 %v610, %v647
        %v664 = vadd.f32 %v611, %v648
        %v665 = vadd.f32 %v612, %v649
        %v666 = vadd.f32 %v613, %v650
        %v667 = vadd.f32 %v614, %v651
        %v668 = vadd.f32 %v615, %v652
        %v669 = vadd.f32 %v616, %v653
        %v670 = vadd.f32 %v617, %v654
        %v671 = vadd.f32 %v618, %v655
        %v672 = vadd.f32 %v619, %v656
        %v673 = vld [vmem:[%s565 + $0x2] sm:$0xff]
        %v674 = vld [vmem:[%s565 + $0xa] sm:$0xff]
        %v675 = vld [vmem:[%s565 + $0x1a] sm:$0xff]
        %v676 = vld [vmem:[%s565 + $0x22] sm:$0xff]
        %v677 = vld [vmem:[%s565 + $0x32] sm:$0xff]
        %v678 = vld [vmem:[%s565 + $0x3a] sm:$0xff]
        %v679 = vld [vmem:[%s565 + $0x4a] sm:$0xff]
        %v680 = vld [vmem:[%s565 + $0x52] sm:$0xff]
        %v681 = vld [vmem:[%s565 + $0x62] sm:$0xff]
        %v682 = vld [vmem:[%s565 + $0x6a] sm:$0xff]
        %v683 = vld [vmem:[%s565 + $0x7a] sm:$0xff]
        %v684 = vld [vmem:[%s565 + $0x82] sm:$0xff]
        %v685 = vld [vmem:[%s565 + $0x92] sm:$0xff]
        %v686 = vld [vmem:[%s565 + $0x9a] sm:$0xff]
        %v687 = vld [vmem:[%s565 + $0xaa] sm:$0xff]
        %v688 = vld [vmem:[%s565 + $0xb2] sm:$0xff]
        %v689 = vld [vmem:[%s582 + $0x2] sm:$0x1]
        %v690 = vlaneseq
        %v691 = vshrl.u32 %v690, 7
        %v692 = vsub.s32 0, %v691
        %v693 = vrot.slane %v689, %v692
        %v694 = vmul.f32 %v673, %v693
        %v695 = vmul.f32 %v674, %v693
        %v696 = vmul.f32 %v675, %v693
        %v697 = vmul.f32 %v676, %v693
        %v698 = vmul.f32 %v677, %v693
        %v699 = vmul.f32 %v678, %v693
        %v700 = vmul.f32 %v679, %v693
        %v701 = vmul.f32 %v680, %v693
        %v702 = vmul.f32 %v681, %v693
        %v703 = vmul.f32 %v682, %v693
        %v704 = vmul.f32 %v683, %v693
        %v705 = vmul.f32 %v684, %v693
        %v706 = vmul.f32 %v685, %v693
        %v707 = vmul.f32 %v686, %v693
        %v708 = vmul.f32 %v687, %v693
        %v709 = vmul.f32 %v688, %v693
        %v710 = vadd.f32 %v657, %v694
        %v711 = vadd.f32 %v658, %v695
        %v712 = vadd.f32 %v659, %v696
        %v713 = vadd.f32 %v660, %v697
        %v714 = vadd.f32 %v661, %v698
        %v715 = vadd.f32 %v662, %v699
        %v716 = vadd.f32 %v663, %v700
        %v717 = vadd.f32 %v664, %v701
        %v718 = vadd.f32 %v665, %v702
        %v719 = vadd.f32 %v666, %v703
        %v720 = vadd.f32 %v667, %v704
        %v721 = vadd.f32 %v668, %v705
        %v722 = vadd.f32 %v669, %v706
        %v723 = vadd.f32 %v670, %v707
        %v724 = vadd.f32 %v671, %v708
        %v725 = vadd.f32 %v672, %v709
        %v726 = vld [vmem:[%s2] sm:$0xff]
        %v727 = vld [vmem:[%s2 + $0x8] sm:$0xff]
        %v728 = vld [vmem:[%s2 + $0x10] sm:$0xff]
        %v729 = vld [vmem:[%s2 + $0x18] sm:$0xff]
        %v730 = vld [vmem:[%s2 + $0x20] sm:$0xff]
        %v731 = vld [vmem:[%s2 + $0x28] sm:$0xff]
        %v732 = vld [vmem:[%s2 + $0x30] sm:$0xff]
        %v733 = vld [vmem:[%s2 + $0x38] sm:$0xff]
        %v734 = vld [vmem:[%s2 + $0x40] sm:$0xff]
        %v735 = vld [vmem:[%s2 + $0x48] sm:$0xff]
        %v736 = vld [vmem:[%s2 + $0x50] sm:$0xff]
        %v737 = vld [vmem:[%s2 + $0x58] sm:$0xff]
        %v738 = vld [vmem:[%s2 + $0x60] sm:$0xff]
        %v739 = vld [vmem:[%s2 + $0x68] sm:$0xff]
        %v740 = vld [vmem:[%s2 + $0x70] sm:$0xff]
        %v741 = vld [vmem:[%s2 + $0x78] sm:$0xff]
        %742 = vmatprep.subr.mxu0 0.0
        %743 = vmatpush1.msra.mxu0 %v726
        %744 = vmatprep.subr.mxu0 0.0
        %745 = vmatpush1.msra.mxu0 %v727
        %746 = vmatprep.subr.mxu0 0.0
        %747 = vmatpush1.msra.mxu0 %v728
        %748 = vmatprep.subr.mxu0 0.0
        %749 = vmatpush1.msra.mxu0 %v729
        %750 = vmatprep.subr.mxu0 0.0
        %751 = vmatpush1.msra.mxu0 %v730
        %752 = vmatprep.subr.mxu0 0.0
        %753 = vmatpush1.msra.mxu0 %v731
        %754 = vmatprep.subr.mxu0 0.0
        %755 = vmatpush1.msra.mxu0 %v732
        %756 = vmatprep.subr.mxu0 0.0
        %757 = vmatpush1.msra.mxu0 %v733
        %758 = vmatprep.subr.mxu0 0.0
        %759 = vmatpush1.msra.mxu0 %v734
        %760 = vmatprep.subr.mxu0 0.0
        %761 = vmatpush1.msra.mxu0 %v735
        %762 = vmatprep.subr.mxu0 0.0
        %763 = vmatpush1.msra.mxu0 %v736
        %764 = vmatprep.subr.mxu0 0.0
        %765 = vmatpush1.msra.mxu0 %v737
        %766 = vmatprep.subr.mxu0 0.0
        %767 = vmatpush1.msra.mxu0 %v738
        %768 = vmatprep.subr.mxu0 0.0
        %769 = vmatpush1.msra.mxu0 %v739
        %770 = vmatprep.subr.mxu0 0.0
        %771 = vmatpush1.msra.mxu0 %v740
        %772 = vmatprep.subr.mxu0 0.0
        %773 = vmatpush1.msra.mxu0 %v741
        %774 = vmatprep.subr.mxu0 0.0
        %775 = vmatpush1.msra.mxu0 0.0
        %776 = vmatprep.subr.mxu0 0.0
        %777 = vmatpush1.msra.mxu0 0.0
        %778 = vmatprep.subr.mxu0 0.0
        %779 = vmatpush1.msra.mxu0 0.0
        %780 = vmatprep.subr.mxu0 0.0
        %781 = vmatpush1.msra.mxu0 0.0
        %782 = vmatprep.subr.mxu0 0.0
        %783 = vmatpush1.msra.mxu0 0.0
        %784 = vmatprep.subr.mxu0 0.0
        %785 = vmatpush1.msra.mxu0 0.0
        %786 = vmatprep.subr.mxu0 0.0
        %787 = vmatpush1.msra.mxu0 0.0
        %788 = vmatprep.subr.mxu0 0.0
        %789 = vmatpush1.msra.mxu0 0.0
        %790 = vmatprep.subr.mxu0 0.0
        %791 = vmatpush1.msra.mxu0 0.0
        %792 = vmatprep.subr.mxu0 0.0
        %793 = vmatpush1.msra.mxu0 0.0
        %794 = vmatprep.subr.mxu0 0.0
        %795 = vmatpush1.msra.mxu0 0.0
        %796 = vmatprep.subr.mxu0 0.0
        %797 = vmatpush1.msra.mxu0 0.0
        %798 = vmatprep.subr.mxu0 0.0
        %799 = vmatpush1.msra.mxu0 0.0
        %800 = vmatprep.subr.mxu0 0.0
        %801 = vmatpush1.msra.mxu0 0.0
        %802 = vmatprep.subr.mxu0 0.0
        %803 = vmatpush1.msra.mxu0 0.0
        %804 = vmatprep.subr.mxu0 0.0
        %805 = vmatpush1.msra.mxu0 0.0
        %806 = vmatprep.mubr.f32.mxu0 0.0
        %807 = vmatmul.mubr.f32.gmra.mrb[0].mxu0 %v710
        %v808 = vpop.f32.mrb[0].mxu0
        %v809 = vadd.f32 0.0, %v808
        %v810 = vpop.f32.mrb[0].mxu0
        %811 = vmatprep.mubr.f32.mxu0 0.0
        %812 = vmatmul.mubr.f32.gmra.mrb[0].mxu0 %v711
        %v813 = vpop.f32.mrb[0].mxu0
        %v814 = vadd.f32 0.0, %v813
        %v815 = vpop.f32.mrb[0].mxu0
        %816 = vmatprep.mubr.f32.mxu0 0.0
        %817 = vmatmul.mubr.f32.gmra.mrb[0].mxu0 %v712
        %v818 = vpop.f32.mrb[0].mxu0
        %v819 = vadd.f32 0.0, %v818
        %v820 = vpop.f32.mrb[0].mxu0
        %821 = vmatprep.mubr.f32.mxu0 0.0
        %822 = vmatmul.mubr.f32.gmra.mrb[0].mxu0 %v713
        %v823 = vpop.f32.mrb[0].mxu0
        %v824 = vadd.f32 0.0, %v823
        %v825 = vpop.f32.mrb[0].mxu0
        %826 = vmatprep.mubr.f32.mxu0 0.0
        %827 = vmatmul.mubr.f32.gmra.mrb[0].mxu0 %v714
        %v828 = vpop.f32.mrb[0].mxu0
        %v829 = vadd.f32 0.0, %v828
        %v830 = vpop.f32.mrb[0].mxu0
        %831 = vmatprep.mubr.f32.mxu0 0.0
        %832 = vmatmul.mubr.f32.gmra.mrb[0].mxu0 %v715
        %v833 = vpop.f32.mrb[0].mxu0
        %v834 = vadd.f32 0.0, %v833
        %v835 = vpop.f32.mrb[0].mxu0
        %836 = vmatprep.mubr.f32.mxu0 0.0
        %837 = vmatmul.mubr.f32.gmra.mrb[0].mxu0 %v716
        %v838 = vpop.f32.mrb[0].mxu0
        %v839 = vadd.f32 0.0, %v838
        %v840 = vpop.f32.mrb[0].mxu0
        %841 = vmatprep.mubr.f32.mxu0 0.0
        %842 = vmatmul.mubr.f32.gmra.mrb[0].mxu0 %v717
        %v843 = vpop.f32.mrb[0].mxu0
        %v844 = vadd.f32 0.0, %v843
        %v845 = vpop.f32.mrb[0].mxu0
        %846 = vmatprep.mubr.f32.mxu0 0.0
        %847 = vmatmul.mubr.f32.gmra.mrb[0].mxu0 %v718
        %v848 = vpop.f32.mrb[0].mxu0
        %v849 = vadd.f32 0.0, %v848
        %v850 = vpop.f32.mrb[0].mxu0
        %851 = vmatprep.mubr.f32.mxu0 0.0
        %852 = vmatmul.mubr.f32.gmra.mrb[0].mxu0 %v719
        %v853 = vpop.f32.mrb[0].mxu0
        %v854 = vadd.f32 0.0, %v853
        %v855 = vpop.f32.mrb[0].mxu0
        %856 = vmatprep.mubr.f32.mxu0 0.0
        %857 = vmatmul.mubr.f32.gmra.mrb[0].mxu0 %v720
        %v858 = vpop.f32.mrb[0].mxu0
        %v859 = vadd.f32 0.0, %v858
        %v860 = vpop.f32.mrb[0].mxu0
        %861 = vmatprep.mubr.f32.mxu0 0.0
        %862 = vmatmul.mubr.f32.gmra.mrb[0].mxu0 %v721
        %v863 = vpop.f32.mrb[0].mxu0
        %v864 = vadd.f32 0.0, %v863
        %v865 = vpop.f32.mrb[0].mxu0
        %866 = vmatprep.mubr.f32.mxu0 0.0
        %867 = vmatmul.mubr.f32.gmra.mrb[0].mxu0 %v722
        %v868 = vpop.f32.mrb[0].mxu0
        %v869 = vadd.f32 0.0, %v868
        %v870 = vpop.f32.mrb[0].mxu0
        %871 = vmatprep.mubr.f32.mxu0 0.0
        %872 = vmatmul.mubr.f32.gmra.mrb[0].mxu0 %v723
        %v873 = vpop.f32.mrb[0].mxu0
        %v874 = vadd.f32 0.0, %v873
        %v875 = vpop.f32.mrb[0].mxu0
        %876 = vmatprep.mubr.f32.mxu0 0.0
        %877 = vmatmul.mubr.f32.gmra.mrb[0].mxu0 %v724
        %v878 = vpop.f32.mrb[0].mxu0
        %v879 = vadd.f32 0.0, %v878
        %v880 = vpop.f32.mrb[0].mxu0
        %881 = vmatprep.mubr.f32.mxu0 0.0
        %882 = vmatmul.mubr.f32.gmra.mrb[0].mxu0 %v725
        %v883 = vpop.f32.mrb[0].mxu0
        %v884 = vadd.f32 0.0, %v883
        %v885 = vpop.f32.mrb[0].mxu0
        %886 = vdwg.mxu0
        %v887 = vld [vmem:[%s3] sm:$0x1]
        %v889 = vlaneseq
        %v890 = vshrl.u32 %v889, 7
        %v891 = vsub.s32 0, %v890
        %v892 = vrot.slane %v887, %v891
        %v894 = vmul.f32 %v809, %v892
        %v895 = vmul.f32 %v814, %v892
        %v896 = vmul.f32 %v819, %v892
        %v897 = vmul.f32 %v824, %v892
        %v898 = vmul.f32 %v829, %v892
        %v899 = vmul.f32 %v834, %v892
        %v900 = vmul.f32 %v839, %v892
        %v901 = vmul.f32 %v844, %v892
        %v902 = vmul.f32 %v849, %v892
        %v903 = vmul.f32 %v854, %v892
        %v904 = vmul.f32 %v859, %v892
        %v905 = vmul.f32 %v864, %v892
        %v906 = vmul.f32 %v869, %v892
        %v907 = vmul.f32 %v874, %v892
        %v908 = vmul.f32 %v879, %v892
        %v909 = vmul.f32 %v884, %v892
        %v910 = vld [vmem:[%s4] sm:$0x1]
        %v912 = vlaneseq
        %v913 = vshrl.u32 %v912, 7
        %v914 = vsub.s32 0, %v913
        %v915 = vrot.slane %v910, %v914
        %v917 = vadd.f32 %v894, %v915
        %v918 = vadd.f32 %v895, %v915
        %v919 = vadd.f32 %v896, %v915
        %v920 = vadd.f32 %v897, %v915
        %v921 = vadd.f32 %v898, %v915
        %v922 = vadd.f32 %v899, %v915
        %v923 = vadd.f32 %v900, %v915
        %v924 = vadd.f32 %v901, %v915
        %v925 = vadd.f32 %v902, %v915
        %v926 = vadd.f32 %v903, %v915
        %v927 = vadd.f32 %v904, %v915
        %v928 = vadd.f32 %v905, %v915
        %v929 = vadd.f32 %v906, %v915
        %v930 = vadd.f32 %v907, %v915
        %v931 = vadd.f32 %v908, %v915
        %v932 = vadd.f32 %v909, %v915
        %v933 = vmax.f32 %v917, 0.0
        %v934 = vmax.f32 %v918, 0.0
        %v935 = vmax.f32 %v919, 0.0
        %v936 = vmax.f32 %v920, 0.0
        %v937 = vmax.f32 %v921, 0.0
        %v938 = vmax.f32 %v922, 0.0
        %v939 = vmax.f32 %v923, 0.0
        %v940 = vmax.f32 %v924, 0.0
        %v941 = vmax.f32 %v925, 0.0
        %v942 = vmax.f32 %v926, 0.0
        %v943 = vmax.f32 %v927, 0.0
        %v944 = vmax.f32 %v928, 0.0
        %v945 = vmax.f32 %v929, 0.0
        %v946 = vmax.f32 %v930, 0.0
        %v947 = vmax.f32 %v931, 0.0
        %v948 = vmax.f32 %v932, 0.0
        %949 = vst [vmem:[%s231] sm:$0xff] %v933
        %950 = vst [vmem:[%s231 + $0x8] sm:$0xff] %v934
        %951 = vst [vmem:[%s231 + $0x10] sm:$0xff] %v935
        %952 = vst [vmem:[%s231 + $0x18] sm:$0xff] %v936
        %953 = vst [vmem:[%s231 + $0x20] sm:$0xff] %v937
        %954 = vst [vmem:[%s231 + $0x28] sm:$0xff] %v938
        %955 = vst [vmem:[%s231 + $0x30] sm:$0xff] %v939
        %956 = vst [vmem:[%s231 + $0x38] sm:$0xff] %v940
        %957 = vst [vmem:[%s231 + $0x40] sm:$0xff] %v941
        %958 = vst [vmem:[%s231 + $0x48] sm:$0xff] %v942
        %959 = vst [vmem:[%s231 + $0x50] sm:$0xff] %v943
        %960 = vst [vmem:[%s231 + $0x58] sm:$0xff] %v944
        %961 = vst [vmem:[%s231 + $0x60] sm:$0xff] %v945
        %962 = vst [vmem:[%s231 + $0x68] sm:$0xff] %v946
        %963 = vst [vmem:[%s231 + $0x70] sm:$0xff] %v947
        %964 = vst [vmem:[%s231 + $0x78] sm:$0xff] %v948
        %s965 = sand.u32 %s151, 1
        %s966 = scalar_lea.sflag [#allocation3], %s965
        %s967 = sand.u32 %s151, 1
        %s968 = smul.addr %s967, 128
        %s969 = scalar_lea.vmem [#allocation2], %s968
        // Predicated region
        $region41: #{tpu_custom_call.1} parent=39 // pred_check
          %p970 = pneg %p161
        $region42: #{tpu_custom_call.1} parent=39 // pred_check_branch
          %972 = sbr.rel (%p970) target = $region44
        $region43: #{tpu_custom_call.1} parent=39 // pred_region
          %s973 = smul.u32 8, %s24
          %s975 = ssub.s32 2048, 2048
          %976 = vsyncadd %s966, %s975
          %s977 = smul.addr %s973, 2
          %s978 = smul.addr %s23, 32
          %s979 = sadd.s32 %s977, %s978
          %s980 = smul.addr %s979, 128
          %s981 = scalar_lea.hbm %s5, %s980
          %s982 = sshll.u32 %s969, 4
          %s983 = int_to_ptr.vmem [resolvable:$true] %s982
          %988 = dma.vmem_to_hbm [thread:$0]  %s983, 2048, %s981, %s966, 128, 128, 8
        $region44: #{tpu_custom_call.1} parent=39 // pred_fallthru
          _
      $region40: #{tpu_custom_call.1} parent=5 // pred_fallthru
        _
      %p989 = scmp.le.s32.totalorder 2, %s14
      // Predicated region
      $region45: #{tpu_custom_call.1} parent=5 // pred_check
        %p990 = pneg %p989
      $region46: #{tpu_custom_call.1} parent=5 // pred_check_branch
        %992 = sbr.rel (%p990) target = $region48
      $region47: #{tpu_custom_call.1} parent=5 // pred_region
        %s993 = ssub.s32 %s14, 2
        // Predicated region
        $region49: #{tpu_custom_call.1} parent=47 // pred_check
          %p994 = pneg %p167
        $region50: #{tpu_custom_call.1} parent=47 // pred_check_branch
          %996 = sbr.rel (%p994) target = $region52
        $region51: #{tpu_custom_call.1} parent=47 // pred_region
          %s997 = sand.u32 %s152, 1
          %s998 = scalar_lea.sflag [#allocation3], %s997
          %s999 = sand.u32 %s152, 1
          %s1000 = smul.addr %s999, 128
          %s1001 = scalar_lea.vmem [#allocation2], %s1000
          %1002 = dma.done %s998, 2048
        $region52: #{tpu_custom_call.1} parent=47 // pred_fallthru
          _
      $region48: #{tpu_custom_call.1} parent=5 // pred_fallthru
        _
    $region6: #{tpu_custom_call.1} parent=1 // loop_footer
      %s18 = sadd.s32 1, %s14
    $region7: #{tpu_custom_call.1} parent=1 // loop_footer_branch
      %13 = sbr.rel target = $region3
    $region8: #{tpu_custom_call.1} parent=1 // loop_exit
      _
    %1003 = vsyncpa [#allocation3], 1
    %s1004 = scalar_lea.sflag [#allocation3], 1
    %1005 = vsyncpa %s1004, 1

</llo_original>
